<compile_context>
chip_gen: v7x
topology: tpu7x:2x2x1
jax: 0.10.0
libtpu: 0.0.40
codegen_flags: <defaults>
</compile_context>

<pallas_src>
import functools
import math

import jax
import jax.numpy as jnp
from jax.experimental import pallas as pl
from jax.experimental.pallas import tpu as pltpu


def _flow_gat_kernel(xsel_ref, adj_ref, pe_ref, x_ref, w_ref, *rest,
                     dropout, use_dropout, fuse_cat):
    if use_dropout:
        bits_ref, out_ref = rest
    else:
        (out_ref,) = rest

    # Sparse softmax over each row's nonzero pattern, via exp-cancellation:
    #   attn[i, j] = mask[i, j] * exp(e[j] - gmax) / sum_j mask[i, j] * exp(e[j] - gmax)
    # pe_ref holds exp(e - gmax) as a [1, N] row (computed once in the wrapper).
    mask = adj_ref[...].astype(jnp.float32)                 # [tm, N] 0/1
    p = mask * pe_ref[...]                                  # broadcast [1, N] over rows
    denom = jnp.sum(p, axis=1, keepdims=True)               # [tm, 1]
    inv = pl.reciprocal(jnp.where(denom > 0.0, denom, 1.0), approx=True)
    attn = (p * inv).astype(jnp.bfloat16)                   # rows sum to ~1 (or all-zero)

    # h_prime = attention @ x  (bf16 MXU operands, f32 accumulation)
    h = jnp.dot(attn, x_ref[...], preferred_element_type=jnp.float32)   # [tm, F] f32

    # cat([x_sel, h_prime], dim=1) @ W
    xsel = xsel_ref[...]                                     # bf16 [tm, F]
    h_bf = h.astype(jnp.bfloat16)
    if fuse_cat:
        # Single K=2F MXU push (only when F is lane-aligned so the concat is free).
        cat = jnp.concatenate([xsel, h_bf], axis=1)          # [tm, 2F]
        y = jnp.dot(cat, w_ref[...], preferred_element_type=jnp.float32)
    else:
        f = xsel.shape[1]
        w = w_ref[...]
        y = (jnp.dot(xsel, w[:f, :], preferred_element_type=jnp.float32)
             + jnp.dot(h_bf, w[f:, :], preferred_element_type=jnp.float32))

    y = jnp.tanh(y)                                          # f32 VPU/EUP math (v5e-safe)

    if use_dropout:
        # Inverted dropout: drop with prob `dropout` via integer threshold compare.
        thr = jnp.uint32(min(int(round(dropout * 4294967296.0)), 4294967295))
        keep = bits_ref[...] >= thr
        y = jnp.where(keep, y * jnp.float32(1.0 / (1.0 - dropout)), 0.0)

    # NOTE: for F a multiple of 128 this store is lane-dense; for small F one could pad F
    # to 128 for unmasked vst, at the cost of an extra wrapper slice (not done here).
    out_ref[...] = y.astype(out_ref.dtype)


def _pick_tile_m(M, N, F, vmem_budget_bytes=32 * 1024 * 1024):
    """Largest M tile (aligned to 32 for the int8 adj sublane tiling) that fits the budget."""
    resident = 2 * (N * F * 2 + 2 * F * F * 2 + N * 4)           # x(bf16) + w(bf16) + pe(f32), x2
    per_row = 2 * (N * 1 + F * 2 + F * 4 + F * 4)                # adj + x_sel + bits + out, x2 buf
    tm = (vmem_budget_bytes - resident) // max(per_row, 1)
    tm = max(32, min(512, (tm // 32) * 32))
    return M if tm >= M else int(tm)


def flow_graph_attention(item_id, x, flow_adj, *, a, weight, dropout,
                         training, test_x=None, seed=0):
    """JAX/Pallas equivalent of flow_GraphAttention.forward."""
    N, F = x.shape
    M = int(item_id.shape[0])

    # Glue matching the torch sparse rebuild: gather item_id rows, keep only the index
    # pattern (the torch code sets all values to 1; GAT only uses the indices anyway).
    # TODO(synk): the torch code leaves flow_adj_tmp undefined when len(item_id) == N (latent
    # bug); here we always use the gathered rows.
    # TODO(synk): a fully fused version would scalar-prefetch item_id and DMA-gather the
    # flow_adj rows inside the kernel, removing this extra [M, N] materialization.
    adj_mask = (flow_adj[item_id] != 0).astype(jnp.int8)          # [M, N] int8 0/1

    # e = x @ a, then exp(e - max(e)) once (cancellation makes the per-row max unnecessary).
    e = (x.astype(jnp.float32) @ a.reshape(F, 1).astype(jnp.float32)).reshape(1, N)
    pe = jnp.exp(e - jnp.max(e)).astype(jnp.float32)              # [1, N]

    x_bf = x.astype(jnp.bfloat16)                                 # MXU operand, resident
    x_sel = (x[item_id] if training else test_x).astype(jnp.bfloat16)
    w_bf = weight.astype(jnp.bfloat16)                            # [2F, F], resident

    use_dropout = bool(training) and float(dropout) > 0.0
    fuse_cat = (F % 128 == 0)
    tm = _pick_tile_m(M, N, F)
    grid = (pl.cdiv(M, tm),)

    kernel = functools.partial(_flow_gat_kernel, dropout=float(dropout),
                               use_dropout=use_dropout, fuse_cat=fuse_cat)

    in_specs = [
        pl.BlockSpec((tm, F), lambda i: (i, 0)),          # x_sel (tiled)
        pl.BlockSpec((tm, N), lambda i: (i, 0)),          # adj int8 mask (tiled)
        pl.BlockSpec((1, N), lambda i: (0, 0)),           # pe  (resident)
        pl.BlockSpec((N, F), lambda i: (0, 0)),           # x   (resident, bf16)
        pl.BlockSpec((2 * F, F), lambda i: (0, 0)),       # weight (resident, bf16)
    ]
    args = [x_sel, adj_mask, pe, x_bf, w_bf]
    if use_dropout:
        # TODO(synk): on-chip pltpu.prng_random_bits would avoid this [M, F] HBM read, but it
        # has no CPU/interpret lowering in this environment.
        bits = jax.random.bits(jax.random.PRNGKey(int(seed)), (M, F), dtype=jnp.uint32)
        in_specs.append(pl.BlockSpec((tm, F), lambda i: (i, 0)))
        args.append(bits)

    return pl.pallas_call(
        kernel,
        out_shape=jax.ShapeDtypeStruct((M, F), jnp.float32),
        grid=grid,
        in_specs=in_specs,
        out_specs=pl.BlockSpec((tm, F), lambda i: (i, 0)),
        compiler_params=pltpu.CompilerParams(
            dimension_semantics=("parallel",),            # shards M tiles across v7x's 2 TCs
            vmem_limit_bytes=48 * 1024 * 1024),
    )(*args)


def _reference(item_id, x, flow_adj, a, weight, dropout, training, test_x, seed):
    """Pure-JAX reference (f32) for a silent sanity check; replicates the dropout mask."""
    adj = (flow_adj[item_id] != 0).astype(jnp.float32)
    e = (x @ a).reshape(-1)
    pe = jnp.exp(e - jnp.max(e))
    p = adj * pe[None, :]
    denom = jnp.sum(p, axis=1, keepdims=True)
    attn = p / jnp.where(denom > 0.0, denom, 1.0)
    h = attn @ x
    xs = x[item_id] if training else test_x
    y = jnp.tanh(jnp.concatenate([xs, h], axis=1) @ weight)
    if training and dropout > 0.0:
        bits = jax.random.bits(jax.random.PRNGKey(int(seed)), y.shape, dtype=jnp.uint32)
        thr = jnp.uint32(min(int(round(dropout * 4294967296.0)), 4294967295))
        y = jnp.where(bits >= thr, y / (1.0 - dropout), 0.0)
    return y


if __name__ == "__main__":
    key = jax.random.PRNGKey(0)
    k_x, k_adj, k_a, k_w, k_test = jax.random.split(key, 5)

    N, F, M = 16, 32, 8            # nodes, feature_size, len(item_id)
    dropout = 0.1

    x = jax.random.normal(k_x, (N, F), dtype=jnp.float32)
    flow_adj = (jax.random.uniform(k_adj, (N, N)) < 0.3).astype(jnp.float32)
    item_id = jnp.arange(0, 2 * M, 2, dtype=jnp.int32)             # M < N (sub-sampled branch)
    test_x = jax.random.normal(k_test, (M, F), dtype=jnp.float32)

    # Parameter init matching the module's __init__:
    #   a: xavier_uniform(gain=1.414) on (F, 1);  weight: U(-1/sqrt(F), 1/sqrt(F)) on (2F, F)
    a_bound = 1.414 * math.sqrt(6.0 / (F + 1))
    a_param = jax.random.uniform(k_a, (F, 1), minval=-a_bound, maxval=a_bound,
                                 dtype=jnp.float32)
    stdv = 1.0 / math.sqrt(F)
    weight = jax.random.uniform(k_w, (2 * F, F), minval=-stdv, maxval=stdv,
                                dtype=jnp.float32)

    # Eval path (training=False): deterministic.
    out_eval = flow_graph_attention(item_id, x, flow_adj, a=a_param, weight=weight,
                                    dropout=dropout, training=False, test_x=test_x)
    out_eval = jax.block_until_ready(out_eval)
    ref_eval = _reference(item_id, x, flow_adj, a_param, weight, dropout, False, test_x, 0)
    assert out_eval.shape == (M, F)
    assert jnp.allclose(out_eval, ref_eval, atol=3e-2, rtol=3e-2), "eval mismatch vs reference"

    # Training path (training=True): x[item_id] concat + dropout (mask reproduced in ref).
    out_train = flow_graph_attention(item_id, x, flow_adj, a=a_param, weight=weight,
                                     dropout=dropout, training=True, seed=1234)
    out_train = jax.block_until_ready(out_train)
    ref_train = _reference(item_id, x, flow_adj, a_param, weight, dropout, True, None, 1234)
    assert out_train.shape == (M, F)
    assert jnp.allclose(out_train, ref_train, atol=3e-2, rtol=3e-2), "train mismatch vs reference"

    print("KERNEL_OK")
</pallas_src>

<mosaic_0001>
module attributes {stable_mosaic.version = 11 : i64} {
  func.func @_flow_gat_kernel(%arg0: i32, %arg1: memref<8x32xbf16, #tpu.memory_space<vmem>>, %arg2: memref<8x16xi8, #tpu.memory_space<vmem>>, %arg3: memref<1x16xf32, #tpu.memory_space<vmem>>, %arg4: memref<16x32xbf16, #tpu.memory_space<vmem>>, %arg5: memref<64x32xbf16, #tpu.memory_space<vmem>>, %arg6: memref<8x32xf32, #tpu.memory_space<vmem>>) attributes {dimension_semantics = [#tpu.dimension_semantics<parallel>], iteration_bounds = array<i64: 1>, scalar_prefetch = 0 : i64, scratch_operands = 0 : i64, tpu.core_type = #tpu.core_type<tc>, window_params = [{transform_indices = @transform_0, window_bounds = array<i64: 8, 32>}, {transform_indices = @transform_1, window_bounds = array<i64: 8, 16>}, {pipeline_mode = #tpu.pipeline_mode<synchronous>, transform_indices = @transform_2, window_bounds = array<i64: 1, 16>}, {pipeline_mode = #tpu.pipeline_mode<synchronous>, transform_indices = @transform_3, window_bounds = array<i64: 16, 32>}, {pipeline_mode = #tpu.pipeline_mode<synchronous>, transform_indices = @transform_4, window_bounds = array<i64: 64, 32>}, {transform_indices = @transform_5, window_bounds = array<i64: 8, 32>}]} {
    %c0 = arith.constant 0 : index
    %c0_0 = arith.constant 0 : index
    %0 = vector.load %arg2[%c0, %c0_0] : memref<8x16xi8, #tpu.memory_space<vmem>>, vector<8x16xi8>
    %1 = arith.sitofp %0 : vector<8x16xi8> to vector<8x16xf32>
    %c0_1 = arith.constant 0 : index
    %c0_2 = arith.constant 0 : index
    %2 = vector.load %arg3[%c0_1, %c0_2] : memref<1x16xf32, #tpu.memory_space<vmem>>, vector<1x16xf32>
    %3 = vector.broadcast %2 : vector<1x16xf32> to vector<8x16xf32>
    %4 = arith.mulf %1, %3 : vector<8x16xf32>
    %cst = arith.constant dense<0.000000e+00> : vector<8xf32>
    %5 = vector.multi_reduction <add>, %4, %cst [1] : vector<8x16xf32> to vector<8xf32>
    %6 = vector.shape_cast %5 : vector<8xf32> to vector<8x1xf32>
    %cst_3 = arith.constant 0.000000e+00 : f32
    %7 = vector.broadcast %cst_3 : f32 to vector<8x1xf32>
    %8 = arith.cmpf ogt, %6, %7 : vector<8x1xf32>
    %cst_4 = arith.constant 1.000000e+00 : f32
    %9 = vector.broadcast %cst_4 : f32 to vector<8x1xf32>
    %10 = arith.select %8, %6, %9 : vector<8x1xi1>, vector<8x1xf32>
    %11 = tpu.reciprocal %10 {approx = true} : vector<8x1xf32> -> vector<8x1xf32>
    %12 = vector.broadcast %11 : vector<8x1xf32> to vector<8x16xf32>
    %13 = arith.mulf %4, %12 : vector<8x16xf32>
    %14 = arith.truncf %13 : vector<8x16xf32> to vector<8x16xbf16>
    %c0_5 = arith.constant 0 : index
    %c0_6 = arith.constant 0 : index
    %15 = vector.load %arg4[%c0_5, %c0_6] : memref<16x32xbf16, #tpu.memory_space<vmem>>, vector<16x32xbf16>
    %cst_7 = arith.constant dense<0.000000e+00> : vector<8x32xf32>
    %16 = tpu.matmul %14, %15, %cst_7 {dimension_numbers = #tpu.dot_dimension_numbers<[1], [0], [0], [1], [0, 0, 1, 1], [], []>} : vector<8x16xbf16>, vector<16x32xbf16>, vector<8x32xf32> -> vector<8x32xf32>
    %c0_8 = arith.constant 0 : index
    %c0_9 = arith.constant 0 : index
    %17 = vector.load %arg1[%c0_8, %c0_9] : memref<8x32xbf16, #tpu.memory_space<vmem>>, vector<8x32xbf16>
    %18 = arith.truncf %16 : vector<8x32xf32> to vector<8x32xbf16>
    %c0_10 = arith.constant 0 : index
    %c0_11 = arith.constant 0 : index
    %19 = vector.load %arg5[%c0_10, %c0_11] : memref<64x32xbf16, #tpu.memory_space<vmem>>, vector<64x32xbf16>
    %20 = vector.extract_strided_slice %19 {offsets = [0, 0], sizes = [32, 32], strides = [1, 1]} : vector<64x32xbf16> to vector<32x32xbf16>
    %cst_12 = arith.constant dense<0.000000e+00> : vector<8x32xf32>
    %21 = tpu.matmul %17, %20, %cst_12 {dimension_numbers = #tpu.dot_dimension_numbers<[1], [0], [0], [1], [0, 0, 1, 1], [], []>} : vector<8x32xbf16>, vector<32x32xbf16>, vector<8x32xf32> -> vector<8x32xf32>
    %22 = vector.extract_strided_slice %19 {offsets = [32, 0], sizes = [32, 32], strides = [1, 1]} : vector<64x32xbf16> to vector<32x32xbf16>
    %cst_13 = arith.constant dense<0.000000e+00> : vector<8x32xf32>
    %23 = tpu.matmul %18, %22, %cst_13 {dimension_numbers = #tpu.dot_dimension_numbers<[1], [0], [0], [1], [0, 0, 1, 1], [], []>} : vector<8x32xbf16>, vector<32x32xbf16>, vector<8x32xf32> -> vector<8x32xf32>
    %24 = arith.addf %21, %23 : vector<8x32xf32>
    %25 = math.tanh %24 : vector<8x32xf32>
    %c0_14 = arith.constant 0 : index
    %c0_15 = arith.constant 0 : index
    %26 = vector.load %arg6[%c0_14, %c0_15] : memref<8x32xf32, #tpu.memory_space<vmem>>, vector<8x32xf32>
    tpu.vector_store %arg6[%c0_14, %c0_15], %25 {strides = array<i32>} : memref<8x32xf32, #tpu.memory_space<vmem>>, vector<8x32xf32>,
    return
  }
  func.func @transform_0(%arg0: i32) -> (i32, i32) {
    %c0_i32 = arith.constant 0 : i32
    %c0_i32_0 = arith.constant 0 : i32
    return %arg0, %c0_i32 : i32, i32
  }
  func.func @transform_1(%arg0: i32) -> (i32, i32) {
    %c0_i32 = arith.constant 0 : i32
    %c0_i32_0 = arith.constant 0 : i32
    return %arg0, %c0_i32 : i32, i32
  }
  func.func @transform_2(%arg0: i32) -> (i32, i32) {
    %c0_i32 = arith.constant 0 : i32
    %c0_i32_0 = arith.constant 0 : i32
    %c0_i32_1 = arith.constant 0 : i32
    return %c0_i32, %c0_i32_0 : i32, i32
  }
  func.func @transform_3(%arg0: i32) -> (i32, i32) {
    %c0_i32 = arith.constant 0 : i32
    %c0_i32_0 = arith.constant 0 : i32
    %c0_i32_1 = arith.constant 0 : i32
    return %c0_i32, %c0_i32_0 : i32, i32
  }
  func.func @transform_4(%arg0: i32) -> (i32, i32) {
    %c0_i32 = arith.constant 0 : i32
    %c0_i32_0 = arith.constant 0 : i32
    %c0_i32_1 = arith.constant 0 : i32
    return %c0_i32, %c0_i32_0 : i32, i32
  }
  func.func @transform_5(%arg0: i32) -> (i32, i32) {
    %c0_i32 = arith.constant 0 : i32
    %c0_i32_0 = arith.constant 0 : i32
    return %arg0, %c0_i32 : i32, i32
  }
}

</mosaic_0001>

<llo_original>
// kernel: tpu_custom_call.1
$region0: #{tpu_custom_call.1}
  #allocation0 [shape = 'u32[]', space=smem, size = 0x4, offset = 0x4, fixed_abs, tag = 'smem constant byte address 0x4 - core index']
  #allocation1 [shape = 'u32[144,128]{1,0:T(1,128)}', space=vmem, size = 0x12000, scoped, tag = 'internal scratch']
  %s0 = inlined_call_operand.vmem [shape: bf16[8,32], index: 0, kind: input, shape index: {}]
  %s1 = inlined_call_operand.vmem [shape: s8[8,16], index: 1, kind: input, shape index: {}]
  %s2 = inlined_call_operand.vmem [shape: f32[1,16], index: 2, kind: input, shape index: {}]
  %s3 = inlined_call_operand.vmem [shape: bf16[16,32], index: 3, kind: input, shape index: {}]
  %s4 = inlined_call_operand.vmem [shape: bf16[64,32], index: 4, kind: input, shape index: {}]
  %s5 = inlined_call_operand.hbm [shape: f32[8,32], index: 5, kind: output, shape index: {}]
  %s6 = sld [smem:[#allocation0]]
  $region30: #{tpu_custom_call.1} parent=0
    _
  %s8 = ssub.s32 1, %s6
  %s9 = scalar_select 0, %s8, %s6
  $region1: #{tpu_custom_call.1} parent=0
    #allocation2 [shape = 'u8[4096]{0}', space=vmem, size = 0x1000, scoped, tag = 'output window, operand 0, single buffered']
    #allocation3 [shape = 's32[1]{0}', space=sflag, size = 0x4, scoped, tag = 'scoped memory for tpu_custom_call.1']
    %10 = vsyncpa [#allocation3], 0
    // Predicated region
    $region2: #{tpu_custom_call.1} parent=1 // pred_check
      _
    $region3: #{tpu_custom_call.1} parent=1 // pred_check_branch
      %12 = sbr.rel (0) target = $region5
    $region4: #{tpu_custom_call.1} parent=1 // pred_region
      _
    $region5: #{tpu_custom_call.1} parent=1 // pred_fallthru
      _
    // Predicated region
    $region6: #{tpu_custom_call.1} parent=1 // pred_check
      _
    $region7: #{tpu_custom_call.1} parent=1 // pred_check_branch
      %14 = sbr.rel (0) target = $region9
    $region8: #{tpu_custom_call.1} parent=1 // pred_region
      _
    $region9: #{tpu_custom_call.1} parent=1 // pred_fallthru
      _
    // Predicated region
    $region10: #{tpu_custom_call.1} parent=1 // pred_check
      _
    $region11: #{tpu_custom_call.1} parent=1 // pred_check_branch
      %16 = sbr.rel (0) target = $region13
    $region12: #{tpu_custom_call.1} parent=1 // pred_region
      _
    $region13: #{tpu_custom_call.1} parent=1 // pred_fallthru
      _
    // Predicated region
    $region14: #{tpu_custom_call.1} parent=1 // pred_check
      _
    $region15: #{tpu_custom_call.1} parent=1 // pred_check_branch
      %18 = sbr.rel (0) target = $region17
    $region16: #{tpu_custom_call.1} parent=1 // pred_region
      _
    $region17: #{tpu_custom_call.1} parent=1 // pred_fallthru
      _
    // Predicated region
    $region18: #{tpu_custom_call.1} parent=1 // pred_check
      _
    $region19: #{tpu_custom_call.1} parent=1 // pred_check_branch
      %20 = sbr.rel (0) target = $region21
    $region20: #{tpu_custom_call.1} parent=1 // pred_region
      _
    $region21: #{tpu_custom_call.1} parent=1 // pred_fallthru
      _
    %v22 = vld [vmem:[%s1] sm:$0x3]
    %v23 = vunpack.c.0.s8 %v22
    %v24 = vcvt.s32.f32 %v23
    %v25 = vld [vmem:[%s2] sm:$0x1]
    %v27 = vlaneseq
    %v28 = vshrl.u32 %v27, 7
    %v29 = vsub.s32 0, %v28
    %v30 = vrot.slane %v25, %v29
    %v32 = vmul.f32 %v24, %v30
    %vm33 = vcmask 130048
    %v34 = vsel %vm33, %v32, 0.0
    %35 = vadd.xlane.f32.xlu0 %v34
    %v36 = vpop.xlane.xlu0 %35
    %vm37 = vcmp.gt.f32.partialorder %v36, 0.0
    %v38 = vsel %vm37, %v36, 1.0
    %v39 = vrcp.pop %v38
    %v40 = vmul.f32 %v32, %v39
    %v41 = vpack.c.bf16 %v40, %v40
    %v42 = vld [vmem:[%s3] sm:$0xf]
    %v43 = vld [vmem:[%s3 + $0x4] sm:$0xf]
    %v46 = vunpack.c.l.b16 %v42
    %v47 = vunpack.c.l.b16 %v43
    %v48 = vpack.c.b16 %v47, %v46
    %v51 = vsel %vm33, %v41, 0
    %53 = vmatprep.subr.bf16.mxu0 0
    %54 = vmatpush1.bf16.msra.mxu0 %v48
    %55 = vmatprep.subr.bf16.mxu0 0
    %56 = vmatpush1.bf16.msra.mxu0 0
    %57 = vmatprep.subr.bf16.mxu0 0
    %58 = vmatpush1.bf16.msra.mxu0 0
    %59 = vmatprep.subr.bf16.mxu0 0
    %60 = vmatpush1.bf16.msra.mxu0 0
    %61 = vmatprep.subr.bf16.mxu0 0
    %62 = vmatpush1.bf16.msra.mxu0 0
    %63 = vmatprep.subr.bf16.mxu0 0
    %64 = vmatpush1.bf16.msra.mxu0 0
    %65 = vmatprep.subr.bf16.mxu0 0
    %66 = vmatpush1.bf16.msra.mxu0 0
    %67 = vmatprep.subr.bf16.mxu0 0
    %68 = vmatpush1.bf16.msra.mxu0 0
    %69 = vmatprep.subr.bf16.mxu0 0
    %70 = vmatpush1.bf16.msra.mxu0 0
    %71 = vmatprep.subr.bf16.mxu0 0
    %72 = vmatpush1.bf16.msra.mxu0 0
    %73 = vmatprep.subr.bf16.mxu0 0
    %74 = vmatpush1.bf16.msra.mxu0 0
    %75 = vmatprep.subr.bf16.mxu0 0
    %76 = vmatpush1.bf16.msra.mxu0 0
    %77 = vmatprep.subr.bf16.mxu0 0
    %78 = vmatpush1.bf16.msra.mxu0 0
    %79 = vmatprep.subr.bf16.mxu0 0
    %80 = vmatpush1.bf16.msra.mxu0 0
    %81 = vmatprep.subr.bf16.mxu0 0
    %82 = vmatpush1.bf16.msra.mxu0 0
    %83 = vmatprep.subr.bf16.mxu0 0
    %84 = vmatpush1.bf16.msra.mxu0 0
    %85 = vmatprep.mubr.bf16.mxu0 0
    %86 = vmatmul.mubr.bf16.gmra.mrb[0].mxu0 %v51
    %v87 = vpop.f32.mrb[0].mxu0
    %v88 = vadd.f32 0.0, %v87
    %v89 = vpop.f32.mrb[0].mxu0
    %v90 = vpop.f32.mrb[0].mxu0
    %v91 = vpop.f32.mrb[0].mxu0
    %92 = vdwg.mxu0
    %v93 = vld [vmem:[%s0] sm:$0xf]
    %v94 = vpack.c.bf16 %v88, %v88
    %v95 = vld [vmem:[%s4] sm:$0xf]
    %v96 = vld [vmem:[%s4 + $0x4] sm:$0xf]
    %v97 = vld [vmem:[%s4 + $0x8] sm:$0xf]
    %v98 = vld [vmem:[%s4 + $0xc] sm:$0xf]
    %v99 = vld [vmem:[%s4 + $0x10] sm:$0xf]
    %v100 = vld [vmem:[%s4 + $0x14] sm:$0xf]
    %v101 = vld [vmem:[%s4 + $0x18] sm:$0xf]
    %v102 = vld [vmem:[%s4 + $0x1c] sm:$0xf]
    %v107 = vunpack.c.l.b16 %v99
    %v108 = vunpack.c.l.b16 %v100
    %v109 = vunpack.c.l.b16 %v101
    %v110 = vunpack.c.l.b16 %v102
    %v111 = vpack.c.b16 %v108, %v107
    %v112 = vpack.c.b16 %v110, %v109
    %vm115 = vcmask 261120
    %v117 = vsel %vm115, %v94, 0
    %119 = vmatprep.subr.bf16.mxu0 0
    %120 = vmatpush1.bf16.msra.mxu0 %v111
    %121 = vmatprep.subr.bf16.mxu0 0
    %122 = vmatpush1.bf16.msra.mxu0 %v112
    %123 = vmatprep.subr.bf16.mxu0 0
    %124 = vmatpush1.bf16.msra.mxu0 0
    %125 = vmatprep.subr.bf16.mxu0 0
    %126 = vmatpush1.bf16.msra.mxu0 0
    %127 = vmatprep.subr.bf16.mxu0 0
    %128 = vmatpush1.bf16.msra.mxu0 0
    %129 = vmatprep.subr.bf16.mxu0 0
    %130 = vmatpush1.bf16.msra.mxu0 0
    %131 = vmatprep.subr.bf16.mxu0 0
    %132 = vmatpush1.bf16.msra.mxu0 0
    %133 = vmatprep.subr.bf16.mxu0 0
    %134 = vmatpush1.bf16.msra.mxu0 0
    %135 = vmatprep.subr.bf16.mxu0 0
    %136 = vmatpush1.bf16.msra.mxu0 0
    %137 = vmatprep.subr.bf16.mxu0 0
    %138 = vmatpush1.bf16.msra.mxu0 0
    %139 = vmatprep.subr.bf16.mxu0 0
    %140 = vmatpush1.bf16.msra.mxu0 0
    %141 = vmatprep.subr.bf16.mxu0 0
    %142 = vmatpush1.bf16.msra.mxu0 0
    %143 = vmatprep.subr.bf16.mxu0 0
    %144 = vmatpush1.bf16.msra.mxu0 0
    %145 = vmatprep.subr.bf16.mxu0 0
    %146 = vmatpush1.bf16.msra.mxu0 0
    %147 = vmatprep.subr.bf16.mxu0 0
    %148 = vmatpush1.bf16.msra.mxu0 0
    %149 = vmatprep.subr.bf16.mxu0 0
    %150 = vmatpush1.bf16.msra.mxu0 0
    %151 = vmatprep.mubr.bf16.mxu0 0
    %152 = vmatmul.mubr.bf16.gmra.mrb[0].mxu0 %v117
    %v153 = vpop.f32.mrb[0].mxu0
    %v154 = vadd.f32 0.0, %v153
    %v155 = vpop.f32.mrb[0].mxu0
    %v156 = vpop.f32.mrb[0].mxu0
    %v157 = vpop.f32.mrb[0].mxu0
    %158 = vdwg.mxu0
    %v163 = vunpack.c.l.b16 %v95
    %v164 = vunpack.c.l.b16 %v96
    %v165 = vunpack.c.l.b16 %v97
    %v166 = vunpack.c.l.b16 %v98
    %v167 = vpack.c.b16 %v164, %v163
    %v168 = vpack.c.b16 %v166, %v165
    %v172 = vsel %vm115, %v93, 0
    %174 = vmatprep.subr.bf16.mxu0 0
    %175 = vmatpush1.bf16.msra.mxu0 %v167
    %176 = vmatprep.subr.bf16.mxu0 0
    %177 = vmatpush1.bf16.msra.mxu0 %v168
    %178 = vmatprep.subr.bf16.mxu0 0
    %179 = vmatpush1.bf16.msra.mxu0 0
    %180 = vmatprep.subr.bf16.mxu0 0
    %181 = vmatpush1.bf16.msra.mxu0 0
    %182 = vmatprep.subr.bf16.mxu0 0
    %183 = vmatpush1.bf16.msra.mxu0 0
    %184 = vmatprep.subr.bf16.mxu0 0
    %185 = vmatpush1.bf16.msra.mxu0 0
    %186 = vmatprep.subr.bf16.mxu0 0
    %187 = vmatpush1.bf16.msra.mxu0 0
    %188 = vmatprep.subr.bf16.mxu0 0
    %189 = vmatpush1.bf16.msra.mxu0 0
    %190 = vmatprep.subr.bf16.mxu0 0
    %191 = vmatpush1.bf16.msra.mxu0 0
    %192 = vmatprep.subr.bf16.mxu0 0
    %193 = vmatpush1.bf16.msra.mxu0 0
    %194 = vmatprep.subr.bf16.mxu0 0
    %195 = vmatpush1.bf16.msra.mxu0 0
    %196 = vmatprep.subr.bf16.mxu0 0
    %197 = vmatpush1.bf16.msra.mxu0 0
    %198 = vmatprep.subr.bf16.mxu0 0
    %199 = vmatpush1.bf16.msra.mxu0 0
    %200 = vmatprep.subr.bf16.mxu0 0
    %201 = vmatpush1.bf16.msra.mxu0 0
    %202 = vmatprep.subr.bf16.mxu0 0
    %203 = vmatpush1.bf16.msra.mxu0 0
    %204 = vmatprep.subr.bf16.mxu0 0
    %205 = vmatpush1.bf16.msra.mxu0 0
    %206 = vmatprep.mubr.bf16.mxu0 0
    %207 = vmatmul.mubr.bf16.gmra.mrb[0].mxu0 %v172
    %v208 = vpop.f32.mrb[0].mxu0
    %v209 = vadd.f32 %v154, %v208
    %v210 = vpop.f32.mrb[0].mxu0
    %v211 = vpop.f32.mrb[0].mxu0
    %v212 = vpop.f32.mrb[0].mxu0
    %213 = vdwg.mxu0
    %v214 = vtanh.pop %v209
    %215 = vst.msk [vmem:[#allocation2] sm:$0xff] %vm115, %v214
    // Predicated region
    $region22: #{tpu_custom_call.1} parent=1 // pred_check
      _
    $region23: #{tpu_custom_call.1} parent=1 // pred_check_branch
      %217 = sbr.rel (0) target = $region25
    $region24: #{tpu_custom_call.1} parent=1 // pred_region
      %s219 = ssub.s32 128, 128
      %220 = vsyncadd [#allocation3], %s219
      %s222 = sshll.u32 [#allocation2], 4
      %s223 = int_to_ptr.vmem [resolvable:$true] %s222
      %225 = dma.vmem_to_hbm [thread:$0]  %s223, 128, %s5, [#allocation3]
    $region25: #{tpu_custom_call.1} parent=1 // pred_fallthru
      _
    // Predicated region
    $region26: #{tpu_custom_call.1} parent=1 // pred_check
      _
    $region27: #{tpu_custom_call.1} parent=1 // pred_check_branch
      %227 = sbr.rel (0) target = $region29
    $region28: #{tpu_custom_call.1} parent=1 // pred_region
      %228 = dma.done [#allocation3], 128
    $region29: #{tpu_custom_call.1} parent=1 // pred_fallthru
      _
    %229 = vsyncpa [#allocation3], 1

</llo_original>
